<compile_context>
chip_gen: v5e
topology: v5e:2x2
jax: 0.10.0
libtpu: 0.0.40
codegen_flags: <defaults>
</compile_context>

<pallas_src>
import jax
import jax.numpy as jnp
import numpy as np
from jax.experimental import pallas as pl
from jax.experimental.pallas import tpu as pltpu

# Problem sizes (module defaults: in_c=3, out=32, k=3, s=1, p=1; pool 2x2 stride 2)
N, C_IN, H, W = 2, 3, 16, 16
C_OUT = 32
K = 3                      # conv kernel size
P = 1                      # conv padding
HO, WO = H // 2, W // 2    # 8, 8 after the 2x2/2 maxpool
POOL_PIX = HO * WO         # 64 pooled pixels per image
POOL_BLK = N * POOL_PIX    # 128 conv pixels per pool position (lane-tile aligned)
NPIX = 4 * POOL_BLK        # 512 conv output pixels, column order (q, n, ho, wo)
TAPS = C_IN * K * K        # 27 real taps (ci, ky, kx) -- matches OIHW flatten order
TAP_PAD = 32               # taps padded to a sublane-aligned contraction dim
BIAS_ROW = TAPS            # tap row 27 holds the all-ones "bias tap"


def conv_relu_pool_kernel(p_ref, w_ref, o_ref):
    # p_ref: (TAP_PAD, NPIX)    = (32, 512) im2col patches; col = q*128 + n*64 + ho*8 + wo
    #                              row 27 is all-ones (bias tap), rows 28..31 are zero.
    # w_ref: (C_OUT, TAP_PAD)   = (32, 32)  conv weights; col 27 holds the bias.
    # o_ref: (C_OUT, POOL_BLK)  = (32, 128) pooled output, col = n*64 + ho*8 + wo.
    acc = jnp.dot(w_ref[...], p_ref[...],
                  preferred_element_type=jnp.float32)          # (32, 512), bias already folded

    # 2x2 stride-2 max-pool: the 4 members of each pool window live in the four
    # 128-lane-aligned column blocks -> three pure-VPU maximums, no relayout.
    pooled = acc[:, 0:POOL_BLK]
    for q in range(1, 4):
        pooled = jnp.maximum(pooled, acc[:, q * POOL_BLK:(q + 1) * POOL_BLK])  # (32, 128)

    # ReLU after the pool (monotone, so identical result) -> only (32,128) of VPU work.
    # Single full-width 128-lane unmasked store.
    o_ref[...] = jnp.maximum(pooled, 0.0).astype(o_ref.dtype)


def _im2col(x_nchw):
    """(N,C_IN,H,W) -> (TAP_PAD, NPIX) patch matrix with an all-ones bias row.

    Pure data movement; with allow_input_fusion=[0] XLA fuses it into the
    pallas_call operand instead of materializing it in HBM.
    """
    xp = jnp.pad(x_nchw, ((0, 0), (0, 0), (P, P), (P, P)))              # (N, C_IN, 18, 18)
    taps = jnp.stack([xp[:, :, dy:dy + H, dx:dx + W]
                      for dy in range(K) for dx in range(K)], axis=2)   # (N, C_IN, 9, H, W)
    t7 = taps.reshape(N, C_IN, K * K, HO, 2, WO, 2)                     # (n,ci,k,ho,dh,wo,dw)
    pt = jnp.transpose(t7, (1, 2, 4, 6, 0, 3, 5))                       # (ci,k,dh,dw,n,ho,wo)
    patches = pt.reshape(TAPS, NPIX)                                    # (27, 512)
    ones_row = jnp.ones((1, NPIX), patches.dtype)                       # bias tap (row 27)
    zero_rows = jnp.zeros((TAP_PAD - TAPS - 1, NPIX), patches.dtype)    # rows 28..31
    return jnp.concatenate([patches, ones_row, zero_rows], axis=0)      # (32, 512)


def _weights_with_bias(w_oihw, b):
    """(C_OUT,C_IN,K,K),(C_OUT,) -> (C_OUT, TAP_PAD) with bias in column 27."""
    wmat = w_oihw.reshape(C_OUT, TAPS)
    bias_col = b.reshape(C_OUT, 1)
    zero_cols = jnp.zeros((C_OUT, TAP_PAD - TAPS - 1), w_oihw.dtype)
    return jnp.concatenate([wmat, bias_col, zero_cols], axis=1)         # (32, 32)


def net_forward(x_nchw, w_oihw, b):
    """Conv2d(3->32, k=3, s=1, p=1) + ReLU + MaxPool2d(2,2). Input/output NCHW."""
    patches = _im2col(x_nchw)                                            # (32, 512)
    wmat = _weights_with_bias(w_oihw, b)                                 # (32, 32)

    out_flat = pl.pallas_call(
        conv_relu_pool_kernel,
        out_shape=jax.ShapeDtypeStruct((C_OUT, POOL_BLK), x_nchw.dtype),  # (32, 128)
        grid=(1,),
        in_specs=[
            pl.BlockSpec((TAP_PAD, NPIX), lambda i: (0, 0)),
            pl.BlockSpec((C_OUT, TAP_PAD), lambda i: (0, 0)),
        ],
        out_specs=pl.BlockSpec((C_OUT, POOL_BLK), lambda i: (0, 0)),
        compiler_params=pltpu.CompilerParams(
            dimension_semantics=("arbitrary",),
            allow_input_fusion=[0]),          # fuse im2col producer into operand 0
        cost_estimate=pl.CostEstimate(
            flops=2 * C_OUT * TAP_PAD * NPIX,
            transcendentals=0,
            bytes_accessed=(TAP_PAD * NPIX + C_OUT * TAP_PAD
                            + C_OUT * POOL_BLK) * 4),
    )(patches, wmat)

    # (C_OUT, N*HO*WO) -> NCHW: tiny (16 KiB) reorder that fuses with the consumer.
    return out_flat.reshape(C_OUT, N, HO, WO).transpose(1, 0, 2, 3)


def reference_forward(x_nchw, w_oihw, b):
    y = jax.lax.conv_general_dilated(
        x_nchw, w_oihw, window_strides=(1, 1), padding=((P, P), (P, P)),
        dimension_numbers=("NCHW", "OIHW", "NCHW"))
    y = y + b[None, :, None, None]
    y = jnp.maximum(y, 0.0)
    y = jax.lax.reduce_window(
        y, -jnp.inf, jax.lax.max,
        window_dimensions=(1, 1, 2, 2), window_strides=(1, 1, 2, 2),
        padding="VALID")
    return y


if __name__ == "__main__":
    key = jax.random.PRNGKey(0)
    kx, kw, kb = jax.random.split(key, 3)

    # Deterministic parameter init (PyTorch-style uniform(-1/sqrt(fan_in), +1/sqrt(fan_in))).
    fan_in = C_IN * K * K
    bound = 1.0 / np.sqrt(fan_in)
    w_oihw = jax.random.uniform(kw, (C_OUT, C_IN, K, K), jnp.float32,
                                minval=-bound, maxval=bound)
    b = jax.random.uniform(kb, (C_OUT,), jnp.float32, minval=-bound, maxval=bound)

    x = jax.random.normal(kx, (N, C_IN, H, W), jnp.float32)   # NCHW, like PyTorch

    out = jax.jit(net_forward)(x, w_oihw, b)
    out = jax.block_until_ready(out)

    ref = reference_forward(x, w_oihw, b)
    assert out.shape == (N, C_OUT, HO, WO), out.shape
    np.testing.assert_allclose(np.asarray(out), np.asarray(ref),
                               rtol=1e-5, atol=1e-5)
    print("KERNEL_OK")
</pallas_src>

<mosaic_0001>
module attributes {stable_mosaic.version = 11 : i64} {
  func.func @conv_relu_pool_kernel(%arg0: i32, %arg1: memref<32x512xf32, #tpu.memory_space<vmem>>, %arg2: memref<32x32xf32, #tpu.memory_space<vmem>>, %arg3: memref<32x128xf32, #tpu.memory_space<vmem>>) attributes {dimension_semantics = [#tpu.dimension_semantics<arbitrary>], iteration_bounds = array<i64: 1>, scalar_prefetch = 0 : i64, scratch_operands = 0 : i64, tpu.core_type = #tpu.core_type<tc>, window_params = [{pipeline_mode = #tpu.pipeline_mode<synchronous>, transform_indices = @transform_0, window_bounds = array<i64: 32, 512>}, {pipeline_mode = #tpu.pipeline_mode<synchronous>, transform_indices = @transform_1, window_bounds = array<i64: 32, 32>}, {pipeline_mode = #tpu.pipeline_mode<synchronous>, transform_indices = @transform_2, window_bounds = array<i64: 32, 128>}]} {
    %c0 = arith.constant 0 : index
    %c0_0 = arith.constant 0 : index
    %0 = vector.load %arg2[%c0, %c0_0] : memref<32x32xf32, #tpu.memory_space<vmem>>, vector<32x32xf32>
    %c0_1 = arith.constant 0 : index
    %c0_2 = arith.constant 0 : index
    %1 = vector.load %arg1[%c0_1, %c0_2] : memref<32x512xf32, #tpu.memory_space<vmem>>, vector<32x512xf32>
    %cst = arith.constant dense<0.000000e+00> : vector<32x512xf32>
    %2 = tpu.matmul %0, %1, %cst {dimension_numbers = #tpu.dot_dimension_numbers<[1], [0], [0], [1], [0, 0, 1, 1], [], []>} : vector<32x32xf32>, vector<32x512xf32>, vector<32x512xf32> -> vector<32x512xf32>
    %3 = vector.extract_strided_slice %2 {offsets = [0, 0], sizes = [32, 128], strides = [1, 1]} : vector<32x512xf32> to vector<32x128xf32>
    %4 = vector.extract_strided_slice %2 {offsets = [0, 128], sizes = [32, 128], strides = [1, 1]} : vector<32x512xf32> to vector<32x128xf32>
    %5 = arith.maximumf %3, %4 : vector<32x128xf32>
    %6 = vector.extract_strided_slice %2 {offsets = [0, 256], sizes = [32, 128], strides = [1, 1]} : vector<32x512xf32> to vector<32x128xf32>
    %7 = arith.maximumf %5, %6 : vector<32x128xf32>
    %8 = vector.extract_strided_slice %2 {offsets = [0, 384], sizes = [32, 128], strides = [1, 1]} : vector<32x512xf32> to vector<32x128xf32>
    %9 = arith.maximumf %7, %8 : vector<32x128xf32>
    %cst_3 = arith.constant 0.000000e+00 : f32
    %10 = vector.broadcast %cst_3 : f32 to vector<32x128xf32>
    %11 = arith.maximumf %9, %10 : vector<32x128xf32>
    %c0_4 = arith.constant 0 : index
    %c0_5 = arith.constant 0 : index
    %12 = vector.load %arg3[%c0_4, %c0_5] : memref<32x128xf32, #tpu.memory_space<vmem>>, vector<32x128xf32>
    tpu.vector_store %arg3[%c0_4, %c0_5], %11 {strides = array<i32>} : memref<32x128xf32, #tpu.memory_space<vmem>>, vector<32x128xf32>,
    return
  }
  func.func @transform_0(%arg0: i32) -> (i32, i32) {
    %c0_i32 = arith.constant 0 : i32
    %c0_i32_0 = arith.constant 0 : i32
    %c0_i32_1 = arith.constant 0 : i32
    return %c0_i32, %c0_i32_0 : i32, i32
  }
  func.func @transform_1(%arg0: i32) -> (i32, i32) {
    %c0_i32 = arith.constant 0 : i32
    %c0_i32_0 = arith.constant 0 : i32
    %c0_i32_1 = arith.constant 0 : i32
    return %c0_i32, %c0_i32_0 : i32, i32
  }
  func.func @transform_2(%arg0: i32) -> (i32, i32) {
    %c0_i32 = arith.constant 0 : i32
    %c0_i32_0 = arith.constant 0 : i32
    %c0_i32_1 = arith.constant 0 : i32
    return %c0_i32, %c0_i32_0 : i32, i32
  }
}

</mosaic_0001>

<llo_original>
// kernel: net_forward.1
$region0: #{net_forward.1}
  #allocation0 [shape = 'u32[]', space=smem, size = 0x4, offset = 0x4, fixed_abs, tag = 'smem constant byte address 0x4 - core index']
  #allocation1 [shape = 'u32[72,128]{1,0:T(1,128)}', space=vmem, size = 0x9000, scoped, tag = 'internal scratch']
  %s0 = inlined_call_operand.vmem [shape: f32[32,512], index: 0, kind: input, shape index: {}]
  %s1 = inlined_call_operand.vmem [shape: f32[32,32], index: 1, kind: input, shape index: {}]
  %s2 = inlined_call_operand.vmem [shape: f32[32,128], index: 2, kind: output, shape index: {}]
  %s3 = sld [smem:[#allocation0]]
  $region18: #{net_forward.1} parent=0
    _
  %s5 = ssub.s32 1, %s3
  %s6 = scalar_select 0, %s5, %s3
  // Predicated region
  $region2: #{net_forward.1} parent=0 // pred_check
    _
  $region3: #{net_forward.1} parent=0 // pred_check_branch
    %8 = sbr.rel (0) target = $region5
  $region4: #{net_forward.1} parent=0 // pred_region
    _
  $region5: #{net_forward.1} parent=0 // pred_fallthru
    _
  // Predicated region
  $region6: #{net_forward.1} parent=0 // pred_check
    _
  $region7: #{net_forward.1} parent=0 // pred_check_branch
    %10 = sbr.rel (0) target = $region9
  $region8: #{net_forward.1} parent=0 // pred_region
    _
  $region9: #{net_forward.1} parent=0 // pred_fallthru
    _
  %v11 = vld [vmem:[%s1] sm:$0xff]
  %v12 = vld [vmem:[%s1 + $0x8] sm:$0xff]
  %v13 = vld [vmem:[%s1 + $0x10] sm:$0xff]
  %v14 = vld [vmem:[%s1 + $0x18] sm:$0xff]
  %v15 = vld [vmem:[%s0] sm:$0xff]
  %v16 = vld [vmem:[%s0 + $0x8] sm:$0xff]
  %v17 = vld [vmem:[%s0 + $0x10] sm:$0xff]
  %v18 = vld [vmem:[%s0 + $0x18] sm:$0xff]
  %v19 = vld [vmem:[%s0 + $0x20] sm:$0xff]
  %v20 = vld [vmem:[%s0 + $0x28] sm:$0xff]
  %v21 = vld [vmem:[%s0 + $0x30] sm:$0xff]
  %v22 = vld [vmem:[%s0 + $0x38] sm:$0xff]
  %v23 = vld [vmem:[%s0 + $0x40] sm:$0xff]
  %v24 = vld [vmem:[%s0 + $0x48] sm:$0xff]
  %v25 = vld [vmem:[%s0 + $0x50] sm:$0xff]
  %v26 = vld [vmem:[%s0 + $0x58] sm:$0xff]
  %v27 = vld [vmem:[%s0 + $0x60] sm:$0xff]
  %v28 = vld [vmem:[%s0 + $0x68] sm:$0xff]
  %v29 = vld [vmem:[%s0 + $0x70] sm:$0xff]
  %v30 = vld [vmem:[%s0 + $0x78] sm:$0xff]
  %vm31 = vcmask 261120
  %v33 = vsel %vm31, %v11, 0
  %v36 = vsel %vm31, %v12, 0
  %v39 = vsel %vm31, %v13, 0
  %v42 = vsel %vm31, %v14, 0
  %44 = vmatpush.msra.mxu0 0.0
  %45 = vmatpush.msra.mxu0 0.0
  %46 = vmatpush.msra.mxu0 0.0
  %47 = vmatpush.msra.mxu0 0.0
  %48 = vmatpush.msra.mxu0 0.0
  %49 = vmatpush.msra.mxu0 0.0
  %50 = vmatpush.msra.mxu0 0.0
  %51 = vmatpush.msra.mxu0 0.0
  %52 = vmatpush.msra.mxu0 0.0
  %53 = vmatpush.msra.mxu0 0.0
  %54 = vmatpush.msra.mxu0 0.0
  %55 = vmatpush.msra.mxu0 0.0
  %56 = vmatpush.msra.mxu0 %v27
  %57 = vmatpush.msra.mxu0 %v23
  %58 = vmatpush.msra.mxu0 %v19
  %59 = vmatpush.msra.mxu0 %v15
  %60 = vmatmul.f32.gmra.mxu0 %v33
  %v61 = vpop.f32.mrf.mxu0
  %v62 = vadd.f32 0.0, %v61
  %63 = vmatmul.f32.gmra.mxu0 %v36
  %v64 = vpop.f32.mrf.mxu0
  %v65 = vadd.f32 0.0, %v64
  %66 = vmatmul.f32.gmra.mxu0 %v39
  %v67 = vpop.f32.mrf.mxu0
  %v68 = vadd.f32 0.0, %v67
  %69 = vmatmul.f32.gmra.mxu0 %v42
  %v70 = vpop.f32.mrf.mxu0
  %v71 = vadd.f32 0.0, %v70
  %72 = vdwg.mxu0
  %73 = vmatpush.msra.mxu0 0.0
  %74 = vmatpush.msra.mxu0 0.0
  %75 = vmatpush.msra.mxu0 0.0
  %76 = vmatpush.msra.mxu0 0.0
  %77 = vmatpush.msra.mxu0 0.0
  %78 = vmatpush.msra.mxu0 0.0
  %79 = vmatpush.msra.mxu0 0.0
  %80 = vmatpush.msra.mxu0 0.0
  %81 = vmatpush.msra.mxu0 0.0
  %82 = vmatpush.msra.mxu0 0.0
  %83 = vmatpush.msra.mxu0 0.0
  %84 = vmatpush.msra.mxu0 0.0
  %85 = vmatpush.msra.mxu0 %v28
  %86 = vmatpush.msra.mxu0 %v24
  %87 = vmatpush.msra.mxu0 %v20
  %88 = vmatpush.msra.mxu0 %v16
  %89 = vmatmul.f32.gmra.mxu0 %v33
  %v90 = vpop.f32.mrf.mxu0
  %v91 = vadd.f32 0.0, %v90
  %92 = vmatmul.f32.gmra.mxu0 %v36
  %v93 = vpop.f32.mrf.mxu0
  %v94 = vadd.f32 0.0, %v93
  %95 = vmatmul.f32.gmra.mxu0 %v39
  %v96 = vpop.f32.mrf.mxu0
  %v97 = vadd.f32 0.0, %v96
  %98 = vmatmul.f32.gmra.mxu0 %v42
  %v99 = vpop.f32.mrf.mxu0
  %v100 = vadd.f32 0.0, %v99
  %101 = vdwg.mxu0
  %102 = vmatpush.msra.mxu0 0.0
  %103 = vmatpush.msra.mxu0 0.0
  %104 = vmatpush.msra.mxu0 0.0
  %105 = vmatpush.msra.mxu0 0.0
  %106 = vmatpush.msra.mxu0 0.0
  %107 = vmatpush.msra.mxu0 0.0
  %108 = vmatpush.msra.mxu0 0.0
  %109 = vmatpush.msra.mxu0 0.0
  %110 = vmatpush.msra.mxu0 0.0
  %111 = vmatpush.msra.mxu0 0.0
  %112 = vmatpush.msra.mxu0 0.0
  %113 = vmatpush.msra.mxu0 0.0
  %114 = vmatpush.msra.mxu0 %v29
  %115 = vmatpush.msra.mxu0 %v25
  %116 = vmatpush.msra.mxu0 %v21
  %117 = vmatpush.msra.mxu0 %v17
  %118 = vmatmul.f32.gmra.mxu0 %v33
  %v119 = vpop.f32.mrf.mxu0
  %v120 = vadd.f32 0.0, %v119
  %121 = vmatmul.f32.gmra.mxu0 %v36
  %v122 = vpop.f32.mrf.mxu0
  %v123 = vadd.f32 0.0, %v122
  %124 = vmatmul.f32.gmra.mxu0 %v39
  %v125 = vpop.f32.mrf.mxu0
  %v126 = vadd.f32 0.0, %v125
  %127 = vmatmul.f32.gmra.mxu0 %v42
  %v128 = vpop.f32.mrf.mxu0
  %v129 = vadd.f32 0.0, %v128
  %130 = vdwg.mxu0
  %131 = vmatpush.msra.mxu0 0.0
  %132 = vmatpush.msra.mxu0 0.0
  %133 = vmatpush.msra.mxu0 0.0
  %134 = vmatpush.msra.mxu0 0.0
  %135 = vmatpush.msra.mxu0 0.0
  %136 = vmatpush.msra.mxu0 0.0
  %137 = vmatpush.msra.mxu0 0.0
  %138 = vmatpush.msra.mxu0 0.0
  %139 = vmatpush.msra.mxu0 0.0
  %140 = vmatpush.msra.mxu0 0.0
  %141 = vmatpush.msra.mxu0 0.0
  %142 = vmatpush.msra.mxu0 0.0
  %143 = vmatpush.msra.mxu0 %v30
  %144 = vmatpush.msra.mxu0 %v26
  %145 = vmatpush.msra.mxu0 %v22
  %146 = vmatpush.msra.mxu0 %v18
  %147 = vmatmul.f32.gmra.mxu0 %v33
  %v148 = vpop.f32.mrf.mxu0
  %v149 = vadd.f32 0.0, %v148
  %150 = vmatmul.f32.gmra.mxu0 %v36
  %v151 = vpop.f32.mrf.mxu0
  %v152 = vadd.f32 0.0, %v151
  %153 = vmatmul.f32.gmra.mxu0 %v39
  %v154 = vpop.f32.mrf.mxu0
  %v155 = vadd.f32 0.0, %v154
  %156 = vmatmul.f32.gmra.mxu0 %v42
  %v157 = vpop.f32.mrf.mxu0
  %v158 = vadd.f32 0.0, %v157
  %159 = vdwg.mxu0
  %v160 = vmax.f32 %v62, %v91
  %v161 = vmax.f32 %v65, %v94
  %v162 = vmax.f32 %v68, %v97
  %v163 = vmax.f32 %v71, %v100
  %v164 = vmax.f32 %v160, %v120
  %v165 = vmax.f32 %v161, %v123
  %v166 = vmax.f32 %v162, %v126
  %v167 = vmax.f32 %v163, %v129
  %v168 = vmax.f32 %v164, %v149
  %v169 = vmax.f32 %v165, %v152
  %v170 = vmax.f32 %v166, %v155
  %v171 = vmax.f32 %v167, %v158
  %v172 = vmax.f32 %v168, 0.0
  %v173 = vmax.f32 %v169, 0.0
  %v174 = vmax.f32 %v170, 0.0
  %v175 = vmax.f32 %v171, 0.0
  %176 = vst [vmem:[%s2] sm:$0xff] %v172
  %177 = vst [vmem:[%s2 + $0x8] sm:$0xff] %v173
  %178 = vst [vmem:[%s2 + $0x10] sm:$0xff] %v174
  %179 = vst [vmem:[%s2 + $0x18] sm:$0xff] %v175
  // Predicated region
  $region10: #{net_forward.1} parent=0 // pred_check
    _
  $region11: #{net_forward.1} parent=0 // pred_check_branch
    %181 = sbr.rel (0) target = $region13
  $region12: #{net_forward.1} parent=0 // pred_region
    _
  $region13: #{net_forward.1} parent=0 // pred_fallthru
    _
  // Predicated region
  $region14: #{net_forward.1} parent=0 // pred_check
    _
  $region15: #{net_forward.1} parent=0 // pred_check_branch
    %183 = sbr.rel (0) target = $region17
  $region16: #{net_forward.1} parent=0 // pred_region
    _
  $region17: #{net_forward.1} parent=0 // pred_fallthru
    _

</llo_original>
